<compile_context>
chip_gen: v7x
topology: tpu7x:2x2x1
jax: 0.10.0
libtpu: 0.0.40
codegen_flags: <defaults>
</compile_context>

<pallas_src>
import functools
import math

import jax
import jax.numpy as jnp
from jax.experimental import pallas as pl
from jax.experimental.pallas import tpu as pltpu


# ----------------------------------------------------------------------------
# VMEM budget helper (v7x has 64 MiB physical VMEM vs 128 MiB on v5e/v6e)
# ----------------------------------------------------------------------------
def _vmem_budget_bytes():
    cap = 64 * 1024 * 1024  # conservative fallback
    try:
        info = pltpu.get_tpu_info()
        for attr in ("vmem_capacity_bytes", "vmem_size_bytes", "vmem_bytes"):
            v = getattr(info, attr, None)
            if v:
                cap = int(v)
                break
    except Exception:
        pass
    return min(cap // 2, 64 * 1024 * 1024)


# ----------------------------------------------------------------------------
# Pallas kernels
# ----------------------------------------------------------------------------
def _complex_linear_kernel(x_ref, w_ref, b_ref, o_ref):
    """Packed complex linear.

    x_ref: (TM, 2*Cin)  = [x_r | x_i]
    w_ref: (2*Cin, 2*Cout) = [[ Wr^T,  Wi^T],
                              [-Wi^T,  Wr^T]]
    b_ref: (1, 2*Cout) = [b_r - b_i | b_r + b_i]   (faithful to F.linear usage)
    o_ref: (TM, 2*Cout) = [out_r | out_i]
    """
    acc = jnp.dot(x_ref[...], w_ref[...], preferred_element_type=jnp.float32)
    o_ref[...] = (acc + b_ref[...]).astype(o_ref.dtype)


def _complex_attn_kernel(q_ref, k_ref, v_ref, o_ref, *, scale):
    """Batched per-(batch*head) attention on packed complex tensors.

    q/k/v refs: (G, N, 2*D) packed [real | imag].  Contracting over the packed
    2*D axis gives q_r.k_r + q_i.k_i (the torch einsum 'bnhdc,bmhdc->bhnm');
    real-valued softmax weights then hit real & imag parts of v in one matmul.
    """
    q = q_ref[...] * scale          # fold scale into q: O(N*D), not O(N^2)
    k = k_ref[...]
    v = v_ref[...]

    s = jnp.einsum('gnd,gmd->gnm', q, k, preferred_element_type=jnp.float32)
    s = s - jnp.max(s, axis=-1, keepdims=True)
    p = jnp.exp(s)
    denom = jnp.sum(p, axis=-1, keepdims=True)          # (G, N, 1)

    acc = jnp.einsum('gnm,gmd->gnd', p.astype(v.dtype), v,
                     preferred_element_type=jnp.float32)
    # Fold the softmax normalization into the (smaller) output tile; approx
    # reciprocal runs on the EUP slot and is effectively free.
    o_ref[...] = (acc * pl.reciprocal(denom, approx=True)).astype(o_ref.dtype)


# ----------------------------------------------------------------------------
# Wrappers
# ----------------------------------------------------------------------------
def complex_linear_packed(xc, w_packed, b_packed, compute_dtype=jnp.float32):
    """xc: (M, 2*Cin) packed; w_packed: (2*Cin, 2*Cout); b_packed: (1, 2*Cout)."""
    M, K = xc.shape
    O = w_packed.shape[1]
    in_bytes = jnp.dtype(compute_dtype).itemsize

    budget = _vmem_budget_bytes()
    weight_bytes = 2 * K * O * in_bytes + 2 * O * 4       # resident (count x2)
    row_bytes = 2 * K * in_bytes + 2 * O * 4               # double-buffered i/o
    avail = max(int(budget * 0.8) - weight_bytes, row_bytes * 8)
    rows_fit = max(8, (avail // row_bytes) // 8 * 8)
    tm = min(M, rows_fit)
    grid = (pl.cdiv(M, tm),)

    xc_c = xc.astype(compute_dtype)
    w_c = w_packed.astype(compute_dtype)

    cost = pl.CostEstimate(
        flops=int(2 * M * K * O),
        transcendentals=0,
        bytes_accessed=int(M * K * in_bytes + K * O * in_bytes
                           + M * O * 4 + O * 4))

    return pl.pallas_call(
        _complex_linear_kernel,
        out_shape=jax.ShapeDtypeStruct((M, O), jnp.float32),
        grid=grid,
        in_specs=[pl.BlockSpec((tm, K), lambda i: (i, 0)),
                  pl.BlockSpec((K, O), lambda i: (0, 0)),   # resident weights
                  pl.BlockSpec((1, O), lambda i: (0, 0))],  # resident bias
        out_specs=pl.BlockSpec((tm, O), lambda i: (i, 0)),
        compiler_params=pltpu.CompilerParams(
            dimension_semantics=("parallel",),
            vmem_limit_bytes=int(budget)),
        cost_estimate=cost,
    )(xc_c, w_c, b_packed)


def complex_attention_core(q, k, v, scale, compute_dtype=jnp.float32):
    """q, k, v: (B*H, N, 2*D) packed; returns (B*H, N, 2*D) packed float32."""
    BH, N, D2 = q.shape
    in_bytes = jnp.dtype(compute_dtype).itemsize

    budget = _vmem_budget_bytes()
    # per (batch*head): double-buffered 3 inputs + 1 output, plus score temps.
    per_head = 2 * (3 * N * D2 * in_bytes + N * D2 * 4) + 3 * N * N * 4
    g = max(1, min(BH, int(budget * 0.6) // max(per_head, 1)))
    while BH % g:     # round down to a divisor of B*H
        g -= 1
    grid = (BH // g,)

    qc = q.astype(compute_dtype)
    kc = k.astype(compute_dtype)
    vc = v.astype(compute_dtype)

    spec = pl.BlockSpec((g, N, D2), lambda i: (i, 0, 0))
    cost = pl.CostEstimate(
        flops=int(4 * BH * N * N * D2),
        transcendentals=int(BH * N * N + BH * N),
        bytes_accessed=int(3 * BH * N * D2 * in_bytes + BH * N * D2 * 4))

    kern = functools.partial(_complex_attn_kernel, scale=scale)
    return pl.pallas_call(
        kern,
        out_shape=jax.ShapeDtypeStruct((BH, N, D2), jnp.float32),
        grid=grid,
        in_specs=[spec, spec, spec],
        out_specs=spec,
        compiler_params=pltpu.CompilerParams(
            dimension_semantics=("parallel",),
            vmem_limit_bytes=int(budget)),
        cost_estimate=cost,
    )(qc, kc, vc)


# ----------------------------------------------------------------------------
# Parameter packing (small, one-off JAX ops on weight tensors)
# ----------------------------------------------------------------------------
def pack_complex_weight(wr, wi):
    """wr, wi: (Cout, Cin) -> (2*Cin, 2*Cout) packed for the fused contraction."""
    top = jnp.concatenate([wr.T, wi.T], axis=1)     # x_r rows
    bot = jnp.concatenate([-wi.T, wr.T], axis=1)    # x_i rows
    return jnp.concatenate([top, bot], axis=0)


def pack_complex_bias(br, bi):
    """Faithful to ComplexLinear.forward: F.linear adds its bias to each term,
    so out_real gets (b_r - b_i) and out_imag gets (b_r + b_i)."""
    return jnp.concatenate([br - bi, br + bi]).reshape(1, -1).astype(jnp.float32)


# ----------------------------------------------------------------------------
# Full forward
# ----------------------------------------------------------------------------
def complex_attention_forward(x, params, num_heads, compute_dtype=jnp.float32):
    """x: (B, N, C, 2) float32. Returns (B, N, C, 2) float32."""
    B, N, C, _ = x.shape
    H = num_heads
    D = C // H
    scale = 1.0 / math.sqrt(D)

    # pack complex axis into features: (B*N, 2C) = [real | imag]
    xc = jnp.moveaxis(x, -1, -2).reshape(B * N, 2 * C)

    w_qkv = pack_complex_weight(params['qkv_wr'], params['qkv_wi'])
    b_qkv = pack_complex_bias(params['qkv_br'], params['qkv_bi'])
    w_out = pack_complex_weight(params['out_wr'], params['out_wi'])
    b_out = pack_complex_bias(params['out_br'], params['out_bi'])

    # to_qkv: (B*N, 6C) packed columns = [q_r k_r v_r | q_i k_i v_i]
    qkv = complex_linear_packed(xc, w_qkv, b_qkv, compute_dtype)

    # split heads -> (3, B*H, N, 2D) packed [real D | imag D]
    t = qkv.reshape(B, N, 2, 3, H, D)
    t = jnp.transpose(t, (3, 0, 4, 1, 2, 5)).reshape(3, B * H, N, 2 * D)
    q, k, v = t[0], t[1], t[2]

    o = complex_attention_core(q, k, v, scale, compute_dtype)   # (B*H, N, 2D)

    # merge heads back -> packed (B*N, 2C)
    o = o.reshape(B, H, N, 2, D)
    o = jnp.transpose(o, (0, 2, 3, 1, 4)).reshape(B * N, 2 * C)

    # to_out: (B*N, 2C) packed
    y = complex_linear_packed(o, w_out, b_out, compute_dtype)
    y = y.reshape(B, N, 2, C)
    return jnp.moveaxis(y, 2, 3)   # (B, N, C, 2)


# ----------------------------------------------------------------------------
# Deterministic parameter init (mirrors ComplexLinear.reset_parameters bounds)
# ----------------------------------------------------------------------------
def init_complex_linear(key, in_features, out_features):
    k1, k2, k3, k4 = jax.random.split(key, 4)
    bound = 1.0 / math.sqrt(in_features)  # kaiming_uniform(a=sqrt(5)) bound
    wr = jax.random.uniform(k1, (out_features, in_features), jnp.float32,
                            -bound, bound)
    wi = jax.random.uniform(k2, (out_features, in_features), jnp.float32,
                            -bound, bound)
    br = jax.random.uniform(k3, (out_features,), jnp.float32, -bound, bound)
    bi = jax.random.uniform(k4, (out_features,), jnp.float32, -bound, bound)
    return wr, wi, br, bi


# ----------------------------------------------------------------------------
# Pure-JAX reference mirroring the PyTorch module exactly
# ----------------------------------------------------------------------------
def reference_forward(x, params, num_heads):
    B, N, C, _ = x.shape
    H = num_heads
    D = C // H
    scale = 1.0 / math.sqrt(D)
    xr, xi = x[..., 0], x[..., 1]

    def clin(xr, xi, wr, wi, br, bi):
        # F.linear adds its bias to each term, hence (br - bi) / (br + bi).
        out_r = (xr @ wr.T + br) - (xi @ wi.T + bi)
        out_i = (xr @ wi.T + bi) + (xi @ wr.T + br)
        return out_r, out_i

    qkv_r, qkv_i = clin(xr, xi, params['qkv_wr'], params['qkv_wi'],
                        params['qkv_br'], params['qkv_bi'])
    qkv = jnp.stack([qkv_r, qkv_i], axis=-1)            # (B, N, 3C, 2)
    q, k, v = jnp.split(qkv, 3, axis=2)                 # intended q/k/v split
    q = q.reshape(B, N, H, D, 2)
    k = k.reshape(B, N, H, D, 2)
    v = v.reshape(B, N, H, D, 2)
    attn = jnp.einsum('bnhdc,bmhdc->bhnm', q, k) * scale
    attn = jax.nn.softmax(attn, axis=-1)
    out = jnp.einsum('bhnm,bmhdc->bnhdc', attn, v).reshape(B, N, C, 2)
    y_r, y_i = clin(out[..., 0], out[..., 1],
                    params['out_wr'], params['out_wi'],
                    params['out_br'], params['out_bi'])
    return jnp.stack([y_r, y_i], axis=-1)


# ----------------------------------------------------------------------------
if __name__ == "__main__":
    B, N, dim, num_heads = 2, 8, 32, 8

    key = jax.random.PRNGKey(0)
    kx, kqkv, kout = jax.random.split(key, 3)

    x = jax.random.normal(kx, (B, N, dim, 2), dtype=jnp.float32)

    qkv_wr, qkv_wi, qkv_br, qkv_bi = init_complex_linear(kqkv, dim, dim * 3)
    out_wr, out_wi, out_br, out_bi = init_complex_linear(kout, dim, dim)
    params = dict(qkv_wr=qkv_wr, qkv_wi=qkv_wi, qkv_br=qkv_br, qkv_bi=qkv_bi,
                  out_wr=out_wr, out_wi=out_wi, out_br=out_br, out_bi=out_bi)

    y_ref = reference_forward(x, params, num_heads)

    # f32 MXU path: tight check (tolerance covers the approx softmax reciprocal)
    y32 = complex_attention_forward(x, params, num_heads, jnp.float32)
    y32 = jax.block_until_ready(y32)
    assert y32.shape == (B, N, dim, 2)
    assert jnp.allclose(y32, y_ref, rtol=2e-3, atol=2e-3), "f32 mismatch vs reference"

    # bf16 MXU fast path (v6e/v7x): f32 accumulation, looser tolerance
    ybf = complex_attention_forward(x, params, num_heads, jnp.bfloat16)
    ybf = jax.block_until_ready(ybf)
    assert jnp.allclose(ybf, y_ref, rtol=5e-2, atol=5e-2), "bf16 mismatch vs reference"

    print("KERNEL_OK")
</pallas_src>

<mosaic_0001>
module attributes {stable_mosaic.version = 11 : i64} {
  func.func @_complex_linear_kernel(%arg0: i32, %arg1: memref<16x64xf32, #tpu.memory_space<vmem>>, %arg2: memref<64x192xf32, #tpu.memory_space<vmem>>, %arg3: memref<1x192xf32, #tpu.memory_space<vmem>>, %arg4: memref<16x192xf32, #tpu.memory_space<vmem>>) attributes {dimension_semantics = [#tpu.dimension_semantics<parallel>], iteration_bounds = array<i64: 1>, scalar_prefetch = 0 : i64, scratch_operands = 0 : i64, tpu.core_type = #tpu.core_type<tc>, window_params = [{transform_indices = @transform_0, window_bounds = array<i64: 16, 64>}, {pipeline_mode = #tpu.pipeline_mode<synchronous>, transform_indices = @transform_1, window_bounds = array<i64: 64, 192>}, {pipeline_mode = #tpu.pipeline_mode<synchronous>, transform_indices = @transform_2, window_bounds = array<i64: 1, 192>}, {transform_indices = @transform_3, window_bounds = array<i64: 16, 192>}]} {
    %c0 = arith.constant 0 : index
    %c0_0 = arith.constant 0 : index
    %0 = vector.load %arg1[%c0, %c0_0] : memref<16x64xf32, #tpu.memory_space<vmem>>, vector<16x64xf32>
    %c0_1 = arith.constant 0 : index
    %c0_2 = arith.constant 0 : index
    %1 = vector.load %arg2[%c0_1, %c0_2] : memref<64x192xf32, #tpu.memory_space<vmem>>, vector<64x192xf32>
    %cst = arith.constant dense<0.000000e+00> : vector<16x192xf32>
    %2 = tpu.matmul %0, %1, %cst {dimension_numbers = #tpu.dot_dimension_numbers<[1], [0], [0], [1], [0, 0, 1, 1], [], []>} : vector<16x64xf32>, vector<64x192xf32>, vector<16x192xf32> -> vector<16x192xf32>
    %c0_3 = arith.constant 0 : index
    %c0_4 = arith.constant 0 : index
    %3 = vector.load %arg3[%c0_3, %c0_4] : memref<1x192xf32, #tpu.memory_space<vmem>>, vector<1x192xf32>
    %4 = vector.broadcast %3 : vector<1x192xf32> to vector<16x192xf32>
    %5 = arith.addf %2, %4 : vector<16x192xf32>
    %c0_5 = arith.constant 0 : index
    %c0_6 = arith.constant 0 : index
    %6 = vector.load %arg4[%c0_5, %c0_6] : memref<16x192xf32, #tpu.memory_space<vmem>>, vector<16x192xf32>
    tpu.vector_store %arg4[%c0_5, %c0_6], %5 {strides = array<i32>} : memref<16x192xf32, #tpu.memory_space<vmem>>, vector<16x192xf32>,
    return
  }
  func.func @transform_0(%arg0: i32) -> (i32, i32) {
    %c0_i32 = arith.constant 0 : i32
    %c0_i32_0 = arith.constant 0 : i32
    return %arg0, %c0_i32 : i32, i32
  }
  func.func @transform_1(%arg0: i32) -> (i32, i32) {
    %c0_i32 = arith.constant 0 : i32
    %c0_i32_0 = arith.constant 0 : i32
    %c0_i32_1 = arith.constant 0 : i32
    return %c0_i32, %c0_i32_0 : i32, i32
  }
  func.func @transform_2(%arg0: i32) -> (i32, i32) {
    %c0_i32 = arith.constant 0 : i32
    %c0_i32_0 = arith.constant 0 : i32
    %c0_i32_1 = arith.constant 0 : i32
    return %c0_i32, %c0_i32_0 : i32, i32
  }
  func.func @transform_3(%arg0: i32) -> (i32, i32) {
    %c0_i32 = arith.constant 0 : i32
    %c0_i32_0 = arith.constant 0 : i32
    return %arg0, %c0_i32 : i32, i32
  }
}

</mosaic_0001>

<llo_original>
// kernel: tpu_custom_call.1
$region0: #{tpu_custom_call.1}
  #allocation0 [shape = 'u32[]', space=smem, size = 0x4, offset = 0x4, fixed_abs, tag = 'smem constant byte address 0x4 - core index']
  #allocation1 [shape = 'u32[144,128]{1,0:T(1,128)}', space=vmem, size = 0x12000, scoped, tag = 'internal scratch']
  %s0 = inlined_call_operand.hbm [shape: f32[16,64], index: 0, kind: input, shape index: {}]
  %s1 = inlined_call_operand.hbm [shape: f32[64,192], index: 1, kind: input, shape index: {}]
  %s2 = inlined_call_operand.vmem [shape: f32[1,192], index: 2, kind: input, shape index: {}]
  %s3 = inlined_call_operand.hbm [shape: f32[16,192], index: 3, kind: output, shape index: {}]
  %s4 = sld [smem:[#allocation0]]
  $region30: #{tpu_custom_call.1} parent=0
    _
  %s6 = ssub.s32 1, %s4
  %s7 = scalar_select 0, %s6, %s4
  $region1: #{tpu_custom_call.1} parent=0
    #allocation2 [shape = 'u8[8192]{0}', space=vmem, size = 0x2000, scoped, tag = 'input window, operand 0, single buffered']
    #allocation3 [shape = 's32[1]{0}', space=sflag, size = 0x4, scoped, tag = 'scoped memory for tpu_custom_call.1']
    #allocation4 [shape = 's32[1]{0}', space=sflag, size = 0x4, scoped, tag = 'scoped memory for tpu_custom_call.1']
    #allocation5 [shape = 'u8[65536]{0}', space=vmem, size = 0x10000, scoped, tag = 'input window, operand 1, single buffered']
    #allocation6 [shape = 's32[1]{0}', space=sflag, size = 0x4, scoped, tag = 'scoped memory for tpu_custom_call.1']
    #allocation7 [shape = 'u8[16384]{0}', space=vmem, size = 0x4000, scoped, tag = 'output window, operand 0, single buffered']
    %8 = vsyncpa [#allocation3], 0
    %9 = vsyncpa [#allocation6], 0
    %10 = vsyncpa [#allocation4], 0
    // Predicated region
    $region2: #{tpu_custom_call.1} parent=1 // pred_check
      _
    $region3: #{tpu_custom_call.1} parent=1 // pred_check_branch
      %12 = sbr.rel (0) target = $region5
    $region4: #{tpu_custom_call.1} parent=1 // pred_region
      %s14 = ssub.s32 256, 256
      %15 = vsyncadd [#allocation3], %s14
      %s16 = sshll.u32 [#allocation2], 4
      %s17 = int_to_ptr.vmem [resolvable:$true] %s16
      %22 = dma.hbm_to_vmem [thread:$0]  %s0, 256, %s17, [#allocation3], 128, 128, 8
    $region5: #{tpu_custom_call.1} parent=1 // pred_fallthru
      _
    // Predicated region
    $region6: #{tpu_custom_call.1} parent=1 // pred_check
      _
    $region7: #{tpu_custom_call.1} parent=1 // pred_check_branch
      %24 = sbr.rel (0) target = $region9
    $region8: #{tpu_custom_call.1} parent=1 // pred_region
      %s26 = ssub.s32 2048, 2048
      %27 = vsyncadd [#allocation6], %s26
      %s28 = sshll.u32 [#allocation5], 4
      %s29 = int_to_ptr.vmem [resolvable:$true] %s28
      %34 = dma.hbm_to_vmem [thread:$0]  %s1, 2048, %s29, [#allocation6], 256, 256, 16
    $region9: #{tpu_custom_call.1} parent=1 // pred_fallthru
      _
    // Predicated region
    $region10: #{tpu_custom_call.1} parent=1 // pred_check
      _
    $region11: #{tpu_custom_call.1} parent=1 // pred_check_branch
      %36 = sbr.rel (0) target = $region13
    $region12: #{tpu_custom_call.1} parent=1 // pred_region
      _
    $region13: #{tpu_custom_call.1} parent=1 // pred_fallthru
      _
    // Predicated region
    $region14: #{tpu_custom_call.1} parent=1 // pred_check
      _
    $region15: #{tpu_custom_call.1} parent=1 // pred_check_branch
      %38 = sbr.rel (0) target = $region17
    $region16: #{tpu_custom_call.1} parent=1 // pred_region
      %39 = dma.done [#allocation3], 256
    $region17: #{tpu_custom_call.1} parent=1 // pred_fallthru
      _
    // Predicated region
    $region18: #{tpu_custom_call.1} parent=1 // pred_check
      _
    $region19: #{tpu_custom_call.1} parent=1 // pred_check_branch
      %41 = sbr.rel (0) target = $region21
    $region20: #{tpu_custom_call.1} parent=1 // pred_region
      %42 = dma.done [#allocation6], 2048
    $region21: #{tpu_custom_call.1} parent=1 // pred_fallthru
      _
    %v43 = vld [vmem:[#allocation2] sm:$0xff]
    %v44 = vld [vmem:[#allocation2 + $0x8] sm:$0xff]
    %v45 = vld [vmem:[#allocation5] sm:$0xff]
    %v46 = vld [vmem:[#allocation5 + $0x8] sm:$0xff]
    %v47 = vld [vmem:[#allocation5 + $0x10] sm:$0xff]
    %v48 = vld [vmem:[#allocation5 + $0x18] sm:$0xff]
    %v49 = vld [vmem:[#allocation5 + $0x20] sm:$0xff]
    %v50 = vld [vmem:[#allocation5 + $0x28] sm:$0xff]
    %v51 = vld [vmem:[#allocation5 + $0x30] sm:$0xff]
    %v52 = vld [vmem:[#allocation5 + $0x38] sm:$0xff]
    %v53 = vld [vmem:[#allocation5 + $0x40] sm:$0xff]
    %v54 = vld [vmem:[#allocation5 + $0x48] sm:$0xff]
    %v55 = vld [vmem:[#allocation5 + $0x50] sm:$0xff]
    %v56 = vld [vmem:[#allocation5 + $0x58] sm:$0xff]
    %v57 = vld [vmem:[#allocation5 + $0x60] sm:$0xff]
    %v58 = vld [vmem:[#allocation5 + $0x68] sm:$0xff]
    %v59 = vld [vmem:[#allocation5 + $0x70] sm:$0xff]
    %v60 = vld [vmem:[#allocation5 + $0x78] sm:$0xff]
    %v61 = vld [vmem:[%s2] sm:$0x3]
    %v63 = vlaneseq
    %v64 = vshrl.u32 %v63, 7
    %v65 = vsub.s32 0, %v64
    %v66 = vrot.slane %v61, %v65
    %v67 = vlaneseq
    %v68 = vshrl.u32 %v67, 7
    %v69 = vsub.s32 1, %v68
    %v70 = vrot.slane %v61, %v69
    %vm73 = vcmask 523264
    %v75 = vsel %vm73, %v43, 0
    %v78 = vsel %vm73, %v44, 0
    %80 = vmatprep.subr.mxu0 %v46
    %81 = vmatpush1.msra.mxu0 %v45
    %82 = vmatprep.subr.mxu0 %v48
    %83 = vmatpush1.msra.mxu0 %v47
    %84 = vmatprep.subr.mxu0 %v50
    %85 = vmatpush1.msra.mxu0 %v49
    %86 = vmatprep.subr.mxu0 %v52
    %87 = vmatpush1.msra.mxu0 %v51
    %88 = vmatprep.subr.mxu0 %v54
    %89 = vmatpush1.msra.mxu0 %v53
    %90 = vmatprep.subr.mxu0 %v56
    %91 = vmatpush1.msra.mxu0 %v55
    %92 = vmatprep.subr.mxu0 %v58
    %93 = vmatpush1.msra.mxu0 %v57
    %94 = vmatprep.subr.mxu0 %v60
    %95 = vmatpush1.msra.mxu0 %v59
    %96 = vmatprep.subr.mxu0 0.0
    %97 = vmatpush1.msra.mxu0 0.0
    %98 = vmatprep.subr.mxu0 0.0
    %99 = vmatpush1.msra.mxu0 0.0
    %100 = vmatprep.subr.mxu0 0.0
    %101 = vmatpush1.msra.mxu0 0.0
    %102 = vmatprep.subr.mxu0 0.0
    %103 = vmatpush1.msra.mxu0 0.0
    %104 = vmatprep.subr.mxu0 0.0
    %105 = vmatpush1.msra.mxu0 0.0
    %106 = vmatprep.subr.mxu0 0.0
    %107 = vmatpush1.msra.mxu0 0.0
    %108 = vmatprep.subr.mxu0 0.0
    %109 = vmatpush1.msra.mxu0 0.0
    %110 = vmatprep.subr.mxu0 0.0
    %111 = vmatpush1.msra.mxu0 0.0
    %112 = vmatprep.subr.mxu0 0.0
    %113 = vmatpush1.msra.mxu0 0.0
    %114 = vmatprep.subr.mxu0 0.0
    %115 = vmatpush1.msra.mxu0 0.0
    %116 = vmatprep.subr.mxu0 0.0
    %117 = vmatpush1.msra.mxu0 0.0
    %118 = vmatprep.subr.mxu0 0.0
    %119 = vmatpush1.msra.mxu0 0.0
    %120 = vmatprep.subr.mxu0 0.0
    %121 = vmatpush1.msra.mxu0 0.0
    %122 = vmatprep.subr.mxu0 0.0
    %123 = vmatpush1.msra.mxu0 0.0
    %124 = vmatprep.subr.mxu0 0.0
    %125 = vmatpush1.msra.mxu0 0.0
    %126 = vmatprep.subr.mxu0 0.0
    %127 = vmatpush1.msra.mxu0 0.0
    %128 = vmatprep.subr.mxu0 0.0
    %129 = vmatpush1.msra.mxu0 0.0
    %130 = vmatprep.subr.mxu0 0.0
    %131 = vmatpush1.msra.mxu0 0.0
    %132 = vmatprep.subr.mxu0 0.0
    %133 = vmatpush1.msra.mxu0 0.0
    %134 = vmatprep.subr.mxu0 0.0
    %135 = vmatpush1.msra.mxu0 0.0
    %136 = vmatprep.subr.mxu0 0.0
    %137 = vmatpush1.msra.mxu0 0.0
    %138 = vmatprep.subr.mxu0 0.0
    %139 = vmatpush1.msra.mxu0 0.0
    %140 = vmatprep.subr.mxu0 0.0
    %141 = vmatpush1.msra.mxu0 0.0
    %142 = vmatprep.subr.mxu0 0.0
    %143 = vmatpush1.msra.mxu0 0.0
    %144 = vmatprep.mubr.f32.mxu0 0.0
    %145 = vmatmul.mubr.f32.gmra.mrb[0].mxu0 %v75
    %v146 = vpop.f32.mrb[0].mxu0
    %v147 = vadd.f32 %v66, %v146
    %v148 = vpop.f32.mrb[0].mxu0
    %v149 = vadd.f32 %v70, %v148
    %150 = vmatprep.mubr.f32.mxu0 0.0
    %151 = vmatmul.mubr.f32.gmra.mrb[0].mxu0 %v78
    %v152 = vpop.f32.mrb[0].mxu0
    %v153 = vadd.f32 %v66, %v152
    %v154 = vpop.f32.mrb[0].mxu0
    %v155 = vadd.f32 %v70, %v154
    %156 = vdwg.mxu0
    %157 = vst [vmem:[#allocation7] sm:$0xff] %v147
    %158 = vst.msk [vmem:[#allocation7 + $0x8] sm:$0xff] %vm73, %v149
    %159 = vst [vmem:[#allocation7 + $0x10] sm:$0xff] %v153
    %160 = vst.msk [vmem:[#allocation7 + $0x18] sm:$0xff] %vm73, %v155
    // Predicated region
    $region22: #{tpu_custom_call.1} parent=1 // pred_check
      _
    $region23: #{tpu_custom_call.1} parent=1 // pred_check_branch
      %162 = sbr.rel (0) target = $region25
    $region24: #{tpu_custom_call.1} parent=1 // pred_region
      %s164 = ssub.s32 512, 512
      %165 = vsyncadd [#allocation4], %s164
      %s166 = sshll.u32 [#allocation7], 4
      %s167 = int_to_ptr.vmem [resolvable:$true] %s166
      %172 = dma.vmem_to_hbm [thread:$0]  %s167, 512, %s3, [#allocation4], 256, 256, 16
    $region25: #{tpu_custom_call.1} parent=1 // pred_fallthru
      _
    // Predicated region
    $region26: #{tpu_custom_call.1} parent=1 // pred_check
      _
    $region27: #{tpu_custom_call.1} parent=1 // pred_check_branch
      %174 = sbr.rel (0) target = $region29
    $region28: #{tpu_custom_call.1} parent=1 // pred_region
      %175 = dma.done [#allocation4], 512
    $region29: #{tpu_custom_call.1} parent=1 // pred_fallthru
      _
    %176 = vsyncpa [#allocation3], 1
    %177 = vsyncpa [#allocation6], 1
    %178 = vsyncpa [#allocation4], 1

</llo_original>
